<compile_context>
chip_gen: v6e
topology: v6e:2x2x1
jax: 0.10.0
libtpu: 0.0.40
codegen_flags: <defaults>
</compile_context>

<pallas_src>
import jax
import jax.numpy as jnp
from jax.experimental import pallas as pl
from jax.experimental.pallas import tpu as pltpu


def _round_up(n, m):
    return (n + m - 1) // m * m


def _cdiv(a, b):
    return (a + b - 1) // b


def _mlp_kernel(x_ref, w1_ref, b1_ref, w2_ref, b2_ref,
                w3_ref, b3_ref, w4_ref, b4_ref, o_ref):
    """One batch tile.  x_ref is the native (tile, 7) block; all activations run
    feature-on-sublane / batch-on-lane so elementwise work is dense and the
    (2, tile) output gets unmasked lane-dense stores."""
    cdt = w2_ref.dtype  # compute dtype for layers 2-4 (f32 or bf16)

    # Layer 1: contract the feature axis of BOTH operands (w1: (32, 7), x: (tile, 7))
    # so the activation comes out as (32, tile) with no wrapper-side transpose; the
    # operand re-orientation is absorbed inside the kernel (MXU/XLU slot is idle).
    # Layer 1 is kept in f32 (K = 7, negligible MXU cost, most mature lowering path).
    x = x_ref[...].astype(jnp.float32)
    dn = (((1,), (1,)), ((), ()))
    h = jax.lax.dot_general(w1_ref[...], x, dn, preferred_element_type=jnp.float32)
    h = jnp.maximum(h + b1_ref[...], 0.0)                        # (32, tile) f32

    h = jnp.dot(w2_ref[...], h.astype(cdt), preferred_element_type=jnp.float32)
    h = jnp.maximum(h + b2_ref[...], 0.0)                        # (16, tile) f32
    h = jnp.dot(w3_ref[...], h.astype(cdt), preferred_element_type=jnp.float32)
    h = jnp.maximum(h + b3_ref[...], 0.0)                        # (8, tile) f32
    logits = (jnp.dot(w4_ref[...], h.astype(cdt), preferred_element_type=jnp.float32)
              + b4_ref[...])                                     # (2, tile) f32

    # 2-class softmax == sigmoid of the logit difference (stable form): one EUP exp,
    # no max / second exp / concatenate, and rows sum to 1 by construction.
    z = logits[1:2, :] - logits[0:1, :]
    e = jnp.exp(-jnp.abs(z))
    p_hi = 1.0 / (1.0 + e)                       # probability of the larger logit
    p1 = jnp.where(z >= 0, p_hi, 1.0 - p_hi)
    o_ref[0:1, :] = (1.0 - p1).astype(o_ref.dtype)
    o_ref[1:2, :] = p1.astype(o_ref.dtype)


def vulnerability_model_forward(x, params, *, batch_tile=4096, compute_dtype=None):
    """x: (B, 7) float32 or bfloat16 (bf16 halves the dominant HBM stream).
    params: weights (out, in), biases (out, 1), stored in f32.
    Returns softmax probabilities of shape (B, 2), matching the PyTorch module."""
    B, F = x.shape
    assert F == 7
    cdt = jnp.dtype(compute_dtype) if compute_dtype is not None else x.dtype

    # --- Tile selection (review items 1, 6, 7) -------------------------------------
    b128 = _round_up(max(B, 1), 128)                 # lane-aligned batch extent
    tile_req = max(128, _round_up(batch_tile, 128))  # requested lane-dense tile
    n_steps = max(1, _cdiv(b128, tile_req))
    if b128 >= 256:
        n_steps = max(n_steps, 2)                    # v7x: give both TensorCores work
    tile = _round_up(_cdiv(b128, n_steps), 128)      # waste bounded by < one tile
    grid = _cdiv(b128, tile)                         # == cdiv(B, tile) since tile % 128 == 0
    padded = grid * tile

    # Weights for layers 2-4 in the compute dtype (tiny casts); layer-1 weight and all
    # biases stay f32 (bias add / ReLU / softmax are f32).
    w1 = params["w1"].astype(jnp.float32)
    b1 = params["b1"].astype(jnp.float32)
    w2 = params["w2"].astype(cdt)
    b2 = params["b2"].astype(jnp.float32)
    w3 = params["w3"].astype(cdt)
    b3 = params["b3"].astype(jnp.float32)
    w4 = params["w4"].astype(cdt)
    b4 = params["b4"].astype(jnp.float32)

    def full(arr):
        return pl.BlockSpec(arr.shape, lambda i: (0, 0))

    # Input is tiled directly in its native (B, 7) layout; the final (partial) block
    # is clipped by the pipeline, and the corresponding garbage output columns are
    # sliced off below.  Output array is padded so all stores are in-bounds.
    out_t = pl.pallas_call(
        _mlp_kernel,
        out_shape=jax.ShapeDtypeStruct((2, padded), jnp.float32),
        grid_spec=pltpu.PrefetchScalarGridSpec(
            num_scalar_prefetch=0,
            grid=(grid,),
            in_specs=[
                pl.BlockSpec((tile, 7), lambda i: (i, 0)),   # native-layout batch tile
                full(w1), full(b1),
                full(w2), full(b2),
                full(w3), full(b3),
                full(w4), full(b4),
            ],
            out_specs=pl.BlockSpec((2, tile), lambda i: (0, i)),  # lane-dense output
        ),
        compiler_params=pltpu.CompilerParams(
            dimension_semantics=("parallel",)),
    )(x, w1, b1, w2, b2, w3, b3, w4, b4)

    # The (2, B) -> (B, 2) transpose is tiny (8 B/row) and required to match the module.
    return jnp.transpose(out_t[:, :B])


def init_params(key):
    """Deterministic init matching PyTorch nn.Linear default ranges.
    Weights stored as (out, in); biases stored as (out, 1)."""
    sizes = [(7, 32), (32, 16), (16, 8), (8, 2)]
    params = {}
    for idx, (fan_in, fan_out) in enumerate(sizes, start=1):
        key, kw, kb = jax.random.split(key, 3)
        bound = 1.0 / (fan_in ** 0.5)
        params[f"w{idx}"] = jax.random.uniform(
            kw, (fan_out, fan_in), jnp.float32, -bound, bound)
        params[f"b{idx}"] = jax.random.uniform(
            kb, (fan_out, 1), jnp.float32, -bound, bound)
    return params


def reference_forward(x, params):
    h = jnp.maximum(x @ params["w1"].T + params["b1"].T, 0.0)
    h = jnp.maximum(h @ params["w2"].T + params["b2"].T, 0.0)
    h = jnp.maximum(h @ params["w3"].T + params["b3"].T, 0.0)
    logits = h @ params["w4"].T + params["b4"].T
    return jax.nn.softmax(logits, axis=1)


if __name__ == "__main__":
    key = jax.random.PRNGKey(0)
    kx, kp = jax.random.split(key)
    params = init_params(kp)

    # f32 path (matches the PyTorch module's numerics). Covers: tiny batch with a single
    # partial block (16), a non-multiple-of-128 batch (300), and an exactly-tiled batch (512).
    for B in (16, 300, 512):
        x = jax.random.normal(jax.random.fold_in(kx, B), (B, 7), dtype=jnp.float32)
        out = jax.block_until_ready(vulnerability_model_forward(x, params))
        ref = reference_forward(x, params)
        assert out.shape == (B, 2)
        assert jnp.allclose(out, ref, atol=1e-4, rtol=1e-4), f"f32 mismatch at B={B}"
        assert jnp.allclose(jnp.sum(out, axis=1), 1.0, atol=1e-5), "rows must sum to 1"

    # bf16 input/compute path (halves the HBM input stream); looser tolerance vs f32 reference.
    B = 512
    x32 = jax.random.normal(jax.random.fold_in(kx, 7), (B, 7), dtype=jnp.float32)
    x_bf16 = x32.astype(jnp.bfloat16)
    out_bf16 = jax.block_until_ready(
        vulnerability_model_forward(x_bf16, params, compute_dtype=jnp.bfloat16))
    ref_bf16 = reference_forward(x_bf16.astype(jnp.float32), params)
    assert out_bf16.shape == (B, 2)
    assert jnp.allclose(out_bf16, ref_bf16, atol=2e-2), "bf16 mismatch vs reference"
    assert jnp.allclose(jnp.sum(out_bf16, axis=1), 1.0, atol=1e-5), "rows must sum to 1"

    print("KERNEL_OK")
</pallas_src>

<mosaic_0001>
module attributes {stable_mosaic.version = 11 : i64} {
  func.func @_mlp_kernel(%arg0: i32, %arg1: memref<128x7xf32, #tpu.memory_space<vmem>>, %arg2: memref<32x7xf32, #tpu.memory_space<vmem>>, %arg3: memref<32x1xf32, #tpu.memory_space<vmem>>, %arg4: memref<16x32xf32, #tpu.memory_space<vmem>>, %arg5: memref<16x1xf32, #tpu.memory_space<vmem>>, %arg6: memref<8x16xf32, #tpu.memory_space<vmem>>, %arg7: memref<8x1xf32, #tpu.memory_space<vmem>>, %arg8: memref<2x8xf32, #tpu.memory_space<vmem>>, %arg9: memref<2x1xf32, #tpu.memory_space<vmem>>, %arg10: memref<2x128xf32, #tpu.memory_space<vmem>>) attributes {dimension_semantics = [#tpu.dimension_semantics<parallel>], iteration_bounds = array<i64: 1>, scalar_prefetch = 0 : i64, scratch_operands = 0 : i64, tpu.core_type = #tpu.core_type<tc>, window_params = [{transform_indices = @transform_0, window_bounds = array<i64: 128, 7>}, {pipeline_mode = #tpu.pipeline_mode<synchronous>, transform_indices = @transform_1, window_bounds = array<i64: 32, 7>}, {pipeline_mode = #tpu.pipeline_mode<synchronous>, transform_indices = @transform_2, window_bounds = array<i64: 32, 1>}, {pipeline_mode = #tpu.pipeline_mode<synchronous>, transform_indices = @transform_3, window_bounds = array<i64: 16, 32>}, {pipeline_mode = #tpu.pipeline_mode<synchronous>, transform_indices = @transform_4, window_bounds = array<i64: 16, 1>}, {pipeline_mode = #tpu.pipeline_mode<synchronous>, transform_indices = @transform_5, window_bounds = array<i64: 8, 16>}, {pipeline_mode = #tpu.pipeline_mode<synchronous>, transform_indices = @transform_6, window_bounds = array<i64: 8, 1>}, {pipeline_mode = #tpu.pipeline_mode<synchronous>, transform_indices = @transform_7, window_bounds = array<i64: 2, 8>}, {pipeline_mode = #tpu.pipeline_mode<synchronous>, transform_indices = @transform_8, window_bounds = array<i64: 2, 1>}, {transform_indices = @transform_9, window_bounds = array<i64: 2, 128>}]} {
    %c0 = arith.constant 0 : index
    %c0_0 = arith.constant 0 : index
    %0 = vector.load %arg1[%c0, %c0_0] : memref<128x7xf32, #tpu.memory_space<vmem>>, vector<128x7xf32>
    %c0_1 = arith.constant 0 : index
    %c0_2 = arith.constant 0 : index
    %1 = vector.load %arg2[%c0_1, %c0_2] : memref<32x7xf32, #tpu.memory_space<vmem>>, vector<32x7xf32>
    %cst = arith.constant dense<0.000000e+00> : vector<32x128xf32>
    %2 = tpu.matmul %1, %0, %cst {dimension_numbers = #tpu.dot_dimension_numbers<[1], [1], [0], [0], [0, 0, 1, 0], [], []>} : vector<32x7xf32>, vector<128x7xf32>, vector<32x128xf32> -> vector<32x128xf32>
    %c0_3 = arith.constant 0 : index
    %c0_4 = arith.constant 0 : index
    %3 = vector.load %arg3[%c0_3, %c0_4] : memref<32x1xf32, #tpu.memory_space<vmem>>, vector<32x1xf32>
    %4 = vector.broadcast %3 : vector<32x1xf32> to vector<32x128xf32>
    %5 = arith.addf %2, %4 : vector<32x128xf32>
    %cst_5 = arith.constant 0.000000e+00 : f32
    %6 = vector.broadcast %cst_5 : f32 to vector<32x128xf32>
    %7 = arith.maximumf %5, %6 : vector<32x128xf32>
    %c0_6 = arith.constant 0 : index
    %c0_7 = arith.constant 0 : index
    %8 = vector.load %arg4[%c0_6, %c0_7] : memref<16x32xf32, #tpu.memory_space<vmem>>, vector<16x32xf32>
    %cst_8 = arith.constant dense<0.000000e+00> : vector<16x128xf32>
    %9 = tpu.matmul %8, %7, %cst_8 {dimension_numbers = #tpu.dot_dimension_numbers<[1], [0], [0], [1], [0, 0, 1, 1], [], []>} : vector<16x32xf32>, vector<32x128xf32>, vector<16x128xf32> -> vector<16x128xf32>
    %c0_9 = arith.constant 0 : index
    %c0_10 = arith.constant 0 : index
    %10 = vector.load %arg5[%c0_9, %c0_10] : memref<16x1xf32, #tpu.memory_space<vmem>>, vector<16x1xf32>
    %11 = vector.broadcast %10 : vector<16x1xf32> to vector<16x128xf32>
    %12 = arith.addf %9, %11 : vector<16x128xf32>
    %cst_11 = arith.constant 0.000000e+00 : f32
    %13 = vector.broadcast %cst_11 : f32 to vector<16x128xf32>
    %14 = arith.maximumf %12, %13 : vector<16x128xf32>
    %c0_12 = arith.constant 0 : index
    %c0_13 = arith.constant 0 : index
    %15 = vector.load %arg6[%c0_12, %c0_13] : memref<8x16xf32, #tpu.memory_space<vmem>>, vector<8x16xf32>
    %cst_14 = arith.constant dense<0.000000e+00> : vector<8x128xf32>
    %16 = tpu.matmul %15, %14, %cst_14 {dimension_numbers = #tpu.dot_dimension_numbers<[1], [0], [0], [1], [0, 0, 1, 1], [], []>} : vector<8x16xf32>, vector<16x128xf32>, vector<8x128xf32> -> vector<8x128xf32>
    %c0_15 = arith.constant 0 : index
    %c0_16 = arith.constant 0 : index
    %17 = vector.load %arg7[%c0_15, %c0_16] : memref<8x1xf32, #tpu.memory_space<vmem>>, vector<8x1xf32>
    %18 = vector.broadcast %17 : vector<8x1xf32> to vector<8x128xf32>
    %19 = arith.addf %16, %18 : vector<8x128xf32>
    %cst_17 = arith.constant 0.000000e+00 : f32
    %20 = vector.broadcast %cst_17 : f32 to vector<8x128xf32>
    %21 = arith.maximumf %19, %20 : vector<8x128xf32>
    %c0_18 = arith.constant 0 : index
    %c0_19 = arith.constant 0 : index
    %22 = vector.load %arg8[%c0_18, %c0_19] : memref<2x8xf32, #tpu.memory_space<vmem>>, vector<2x8xf32>
    %cst_20 = arith.constant dense<0.000000e+00> : vector<2x128xf32>
    %23 = tpu.matmul %22, %21, %cst_20 {dimension_numbers = #tpu.dot_dimension_numbers<[1], [0], [0], [1], [0, 0, 1, 1], [], []>} : vector<2x8xf32>, vector<8x128xf32>, vector<2x128xf32> -> vector<2x128xf32>
    %c0_21 = arith.constant 0 : index
    %c0_22 = arith.constant 0 : index
    %24 = vector.load %arg9[%c0_21, %c0_22] : memref<2x1xf32, #tpu.memory_space<vmem>>, vector<2x1xf32>
    %25 = vector.broadcast %24 : vector<2x1xf32> to vector<2x128xf32>
    %26 = arith.addf %23, %25 : vector<2x128xf32>
    %27 = vector.extract_strided_slice %26 {offsets = [1, 0], sizes = [1, 128], strides = [1, 1]} : vector<2x128xf32> to vector<1x128xf32>
    %28 = vector.extract_strided_slice %26 {offsets = [0, 0], sizes = [1, 128], strides = [1, 1]} : vector<2x128xf32> to vector<1x128xf32>
    %29 = arith.subf %27, %28 : vector<1x128xf32>
    %30 = math.absf %29 : vector<1x128xf32>
    %cst_23 = arith.constant 0.000000e+00 : f32
    %31 = vector.broadcast %cst_23 : f32 to vector<1x128xf32>
    %32 = arith.subf %31, %30 : vector<1x128xf32>
    %33 = math.exp %32 : vector<1x128xf32>
    %cst_24 = arith.constant 1.000000e+00 : f32
    %34 = vector.broadcast %cst_24 : f32 to vector<1x128xf32>
    %35 = arith.addf %34, %33 : vector<1x128xf32>
    %cst_25 = arith.constant 1.000000e+00 : f32
    %36 = vector.broadcast %cst_25 : f32 to vector<1x128xf32>
    %37 = arith.divf %36, %35 : vector<1x128xf32>
    %cst_26 = arith.constant 0.000000e+00 : f32
    %38 = vector.broadcast %cst_26 : f32 to vector<1x128xf32>
    %39 = arith.cmpf oge, %29, %38 : vector<1x128xf32>
    %cst_27 = arith.constant 1.000000e+00 : f32
    %40 = vector.broadcast %cst_27 : f32 to vector<1x128xf32>
    %41 = arith.subf %40, %37 : vector<1x128xf32>
    %42 = arith.select %39, %37, %41 : vector<1x128xi1>, vector<1x128xf32>
    %cst_28 = arith.constant 1.000000e+00 : f32
    %43 = vector.broadcast %cst_28 : f32 to vector<1x128xf32>
    %44 = arith.subf %43, %42 : vector<1x128xf32>
    %c0_29 = arith.constant 0 : index
    %c0_30 = arith.constant 0 : index
    %45 = vector.load %arg10[%c0_29, %c0_30] : memref<2x128xf32, #tpu.memory_space<vmem>>, vector<1x128xf32>
    tpu.vector_store %arg10[%c0_29, %c0_30], %44 {strides = array<i32>} : memref<2x128xf32, #tpu.memory_space<vmem>>, vector<1x128xf32>,
    %c1 = arith.constant 1 : index
    %c0_31 = arith.constant 0 : index
    %46 = vector.load %arg10[%c1, %c0_31] : memref<2x128xf32, #tpu.memory_space<vmem>>, vector<1x128xf32>
    tpu.vector_store %arg10[%c1, %c0_31], %42 {strides = array<i32>} : memref<2x128xf32, #tpu.memory_space<vmem>>, vector<1x128xf32>,
    return
  }
  func.func @transform_0(%arg0: i32) -> (i32, i32) {
    %c0_i32 = arith.constant 0 : i32
    %c0_i32_0 = arith.constant 0 : i32
    return %arg0, %c0_i32 : i32, i32
  }
  func.func @transform_1(%arg0: i32) -> (i32, i32) {
    %c0_i32 = arith.constant 0 : i32
    %c0_i32_0 = arith.constant 0 : i32
    %c0_i32_1 = arith.constant 0 : i32
    return %c0_i32, %c0_i32_0 : i32, i32
  }
  func.func @transform_2(%arg0: i32) -> (i32, i32) {
    %c0_i32 = arith.constant 0 : i32
    %c0_i32_0 = arith.constant 0 : i32
    %c0_i32_1 = arith.constant 0 : i32
    return %c0_i32, %c0_i32_0 : i32, i32
  }
  func.func @transform_3(%arg0: i32) -> (i32, i32) {
    %c0_i32 = arith.constant 0 : i32
    %c0_i32_0 = arith.constant 0 : i32
    %c0_i32_1 = arith.constant 0 : i32
    return %c0_i32, %c0_i32_0 : i32, i32
  }
  func.func @transform_4(%arg0: i32) -> (i32, i32) {
    %c0_i32 = arith.constant 0 : i32
    %c0_i32_0 = arith.constant 0 : i32
    %c0_i32_1 = arith.constant 0 : i32
    return %c0_i32, %c0_i32_0 : i32, i32
  }
  func.func @transform_5(%arg0: i32) -> (i32, i32) {
    %c0_i32 = arith.constant 0 : i32
    %c0_i32_0 = arith.constant 0 : i32
    %c0_i32_1 = arith.constant 0 : i32
    return %c0_i32, %c0_i32_0 : i32, i32
  }
  func.func @transform_6(%arg0: i32) -> (i32, i32) {
    %c0_i32 = arith.constant 0 : i32
    %c0_i32_0 = arith.constant 0 : i32
    %c0_i32_1 = arith.constant 0 : i32
    return %c0_i32, %c0_i32_0 : i32, i32
  }
  func.func @transform_7(%arg0: i32) -> (i32, i32) {
    %c0_i32 = arith.constant 0 : i32
    %c0_i32_0 = arith.constant 0 : i32
    %c0_i32_1 = arith.constant 0 : i32
    return %c0_i32, %c0_i32_0 : i32, i32
  }
  func.func @transform_8(%arg0: i32) -> (i32, i32) {
    %c0_i32 = arith.constant 0 : i32
    %c0_i32_0 = arith.constant 0 : i32
    %c0_i32_1 = arith.constant 0 : i32
    return %c0_i32, %c0_i32_0 : i32, i32
  }
  func.func @transform_9(%arg0: i32) -> (i32, i32) {
    %c0_i32 = arith.constant 0 : i32
    %c0_i32_0 = arith.constant 0 : i32
    return %c0_i32, %arg0 : i32, i32
  }
}

</mosaic_0001>

<llo_original>
// kernel: tpu_custom_call.1
$region0: #{tpu_custom_call.1}
  #allocation0 [shape = 'u32[]', space=smem, size = 0x4, offset = 0x4, fixed_abs, tag = 'smem constant byte address 0x4 - core index']
  #allocation1 [shape = 'u32[144,128]{1,0:T(1,128)}', space=vmem, size = 0x12000, scoped, tag = 'internal scratch']
  %s0 = inlined_call_operand.vmem [shape: f32[16,7], index: 0, kind: input, shape index: {}]
  %s1 = inlined_call_operand.vmem [shape: f32[32,7], index: 1, kind: input, shape index: {}]
  %s2 = inlined_call_operand.vmem [shape: f32[32,1], index: 2, kind: input, shape index: {}]
  %s3 = inlined_call_operand.vmem [shape: f32[16,32], index: 3, kind: input, shape index: {}]
  %s4 = inlined_call_operand.vmem [shape: f32[16,1], index: 4, kind: input, shape index: {}]
  %s5 = inlined_call_operand.vmem [shape: f32[8,16], index: 5, kind: input, shape index: {}]
  %s6 = inlined_call_operand.vmem [shape: f32[8,1], index: 6, kind: input, shape index: {}]
  %s7 = inlined_call_operand.vmem [shape: f32[2,8], index: 7, kind: input, shape index: {}]
  %s8 = inlined_call_operand.vmem [shape: f32[2,1], index: 8, kind: input, shape index: {}]
  %s9 = inlined_call_operand.hbm [shape: f32[2,128], index: 9, kind: output, shape index: {}]
  %s10 = sld [smem:[#allocation0]]
  $region46: #{tpu_custom_call.1} parent=0
    _
  %s12 = ssub.s32 1, %s10
  %s13 = scalar_select 0, %s12, %s10
  $region1: #{tpu_custom_call.1} parent=0
    #allocation2 [shape = 'u8[1024]{0}', space=vmem, size = 0x400, scoped, tag = 'output window, operand 0, single buffered']
    #allocation3 [shape = 's32[1]{0}', space=sflag, size = 0x4, scoped, tag = 'scoped memory for tpu_custom_call.1']
    %14 = vsyncpa [#allocation3], 0
    // Predicated region
    $region2: #{tpu_custom_call.1} parent=1 // pred_check
      _
    $region3: #{tpu_custom_call.1} parent=1 // pred_check_branch
      %16 = sbr.rel (0) target = $region5
    $region4: #{tpu_custom_call.1} parent=1 // pred_region
      _
    $region5: #{tpu_custom_call.1} parent=1 // pred_fallthru
      _
    // Predicated region
    $region6: #{tpu_custom_call.1} parent=1 // pred_check
      _
    $region7: #{tpu_custom_call.1} parent=1 // pred_check_branch
      %18 = sbr.rel (0) target = $region9
    $region8: #{tpu_custom_call.1} parent=1 // pred_region
      _
    $region9: #{tpu_custom_call.1} parent=1 // pred_fallthru
      _
    // Predicated region
    $region10: #{tpu_custom_call.1} parent=1 // pred_check
      _
    $region11: #{tpu_custom_call.1} parent=1 // pred_check_branch
      %20 = sbr.rel (0) target = $region13
    $region12: #{tpu_custom_call.1} parent=1 // pred_region
      _
    $region13: #{tpu_custom_call.1} parent=1 // pred_fallthru
      _
    // Predicated region
    $region14: #{tpu_custom_call.1} parent=1 // pred_check
      _
    $region15: #{tpu_custom_call.1} parent=1 // pred_check_branch
      %22 = sbr.rel (0) target = $region17
    $region16: #{tpu_custom_call.1} parent=1 // pred_region
      _
    $region17: #{tpu_custom_call.1} parent=1 // pred_fallthru
      _
    // Predicated region
    $region18: #{tpu_custom_call.1} parent=1 // pred_check
      _
    $region19: #{tpu_custom_call.1} parent=1 // pred_check_branch
      %24 = sbr.rel (0) target = $region21
    $region20: #{tpu_custom_call.1} parent=1 // pred_region
      _
    $region21: #{tpu_custom_call.1} parent=1 // pred_fallthru
      _
    // Predicated region
    $region22: #{tpu_custom_call.1} parent=1 // pred_check
      _
    $region23: #{tpu_custom_call.1} parent=1 // pred_check_branch
      %26 = sbr.rel (0) target = $region25
    $region24: #{tpu_custom_call.1} parent=1 // pred_region
      _
    $region25: #{tpu_custom_call.1} parent=1 // pred_fallthru
      _
    // Predicated region
    $region26: #{tpu_custom_call.1} parent=1 // pred_check
      _
    $region27: #{tpu_custom_call.1} parent=1 // pred_check_branch
      %28 = sbr.rel (0) target = $region29
    $region28: #{tpu_custom_call.1} parent=1 // pred_region
      _
    $region29: #{tpu_custom_call.1} parent=1 // pred_fallthru
      _
    // Predicated region
    $region30: #{tpu_custom_call.1} parent=1 // pred_check
      _
    $region31: #{tpu_custom_call.1} parent=1 // pred_check_branch
      %30 = sbr.rel (0) target = $region33
    $region32: #{tpu_custom_call.1} parent=1 // pred_region
      _
    $region33: #{tpu_custom_call.1} parent=1 // pred_fallthru
      _
    // Predicated region
    $region34: #{tpu_custom_call.1} parent=1 // pred_check
      _
    $region35: #{tpu_custom_call.1} parent=1 // pred_check_branch
      %32 = sbr.rel (0) target = $region37
    $region36: #{tpu_custom_call.1} parent=1 // pred_region
      _
    $region37: #{tpu_custom_call.1} parent=1 // pred_fallthru
      _
    %v33 = vld [vmem:[%s0] sm:$0xff]
    %v34 = vld [vmem:[%s0 + $0x8] sm:$0xff]
    %v35 = vld [vmem:[%s0 + $0x10] sm:$0xff]
    %v36 = vld [vmem:[%s0 + $0x18] sm:$0xff]
    %v37 = vld [vmem:[%s0 + $0x20] sm:$0xff]
    %v38 = vld [vmem:[%s0 + $0x28] sm:$0xff]
    %v39 = vld [vmem:[%s0 + $0x30] sm:$0xff]
    %v40 = vld [vmem:[%s0 + $0x38] sm:$0xff]
    %v41 = vld [vmem:[%s0 + $0x40] sm:$0xff]
    %v42 = vld [vmem:[%s0 + $0x48] sm:$0xff]
    %v43 = vld [vmem:[%s0 + $0x50] sm:$0xff]
    %v44 = vld [vmem:[%s0 + $0x58] sm:$0xff]
    %v45 = vld [vmem:[%s0 + $0x60] sm:$0xff]
    %v46 = vld [vmem:[%s0 + $0x68] sm:$0xff]
    %v47 = vld [vmem:[%s0 + $0x70] sm:$0xff]
    %v48 = vld [vmem:[%s0 + $0x78] sm:$0xff]
    %v49 = vld [vmem:[%s1] sm:$0xff]
    %v50 = vld [vmem:[%s1 + $0x8] sm:$0xff]
    %v51 = vld [vmem:[%s1 + $0x10] sm:$0xff]
    %v52 = vld [vmem:[%s1 + $0x18] sm:$0xff]
    %v53 = vld [vmem:[%s2] sm:$0xff]
    %v54 = vld [vmem:[%s2 + $0x8] sm:$0xff]
    %v55 = vld [vmem:[%s2 + $0x10] sm:$0xff]
    %v56 = vld [vmem:[%s2 + $0x18] sm:$0xff]
    %58 = vset.pattern.permute.xlu0 0
    %59 = vperm.xlu0 %58, %v53
    %v60 = vpop.permute.xlu0 %59
    %63 = vset.pattern.permute.xlu0 0
    %64 = vperm.xlu0 %63, %v54
    %v65 = vpop.permute.xlu0 %64
    %68 = vset.pattern.permute.xlu0 0
    %69 = vperm.xlu0 %68, %v55
    %v70 = vpop.permute.xlu0 %69
    %73 = vset.pattern.permute.xlu0 0
    %74 = vperm.xlu0 %73, %v56
    %v75 = vpop.permute.xlu0 %74
    %vm77 = vcmask 56320
    %v79 = vsel %vm77, %v49, 0
    %v82 = vsel %vm77, %v50, 0
    %v85 = vsel %vm77, %v51, 0
    %v88 = vsel %vm77, %v52, 0
    %v91 = vsel %vm77, %v33, 0
    %v94 = vsel %vm77, %v34, 0
    %v97 = vsel %vm77, %v35, 0
    %v100 = vsel %vm77, %v36, 0
    %v103 = vsel %vm77, %v37, 0
    %v106 = vsel %vm77, %v38, 0
    %v109 = vsel %vm77, %v39, 0
    %v112 = vsel %vm77, %v40, 0
    %v115 = vsel %vm77, %v41, 0
    %v118 = vsel %vm77, %v42, 0
    %v121 = vsel %vm77, %v43, 0
    %v124 = vsel %vm77, %v44, 0
    %v127 = vsel %vm77, %v45, 0
    %v130 = vsel %vm77, %v46, 0
    %v133 = vsel %vm77, %v47, 0
    %v136 = vsel %vm77, %v48, 0
    %138 = vmatprep.subr.mxu0 0.0
    %139 = vmatpush1.xpose.msra.mxu0 %v136
    %140 = vmatprep.subr.mxu0 0.0
    %141 = vmatpush1.xpose.msra.mxu0 %v133
    %142 = vmatprep.subr.mxu0 0.0
    %143 = vmatpush1.xpose.msra.mxu0 %v130
    %144 = vmatprep.subr.mxu0 0.0
    %145 = vmatpush1.xpose.msra.mxu0 %v127
    %146 = vmatprep.subr.mxu0 0.0
    %147 = vmatpush1.xpose.msra.mxu0 %v124
    %148 = vmatprep.subr.mxu0 0.0
    %149 = vmatpush1.xpose.msra.mxu0 %v121
    %150 = vmatprep.subr.mxu0 0.0
    %151 = vmatpush1.xpose.msra.mxu0 %v118
    %152 = vmatprep.subr.mxu0 0.0
    %153 = vmatpush1.xpose.msra.mxu0 %v115
    %154 = vmatprep.subr.mxu0 0.0
    %155 = vmatpush1.xpose.msra.mxu0 %v112
    %156 = vmatprep.subr.mxu0 0.0
    %157 = vmatpush1.xpose.msra.mxu0 %v109
    %158 = vmatprep.subr.mxu0 0.0
    %159 = vmatpush1.xpose.msra.mxu0 %v106
    %160 = vmatprep.subr.mxu0 0.0
    %161 = vmatpush1.xpose.msra.mxu0 %v103
    %162 = vmatprep.subr.mxu0 0.0
    %163 = vmatpush1.xpose.msra.mxu0 %v100
    %164 = vmatprep.subr.mxu0 0.0
    %165 = vmatpush1.xpose.msra.mxu0 %v97
    %166 = vmatprep.subr.mxu0 0.0
    %167 = vmatpush1.xpose.msra.mxu0 %v94
    %168 = vmatprep.subr.mxu0 0.0
    %169 = vmatpush1.xpose.msra.mxu0 %v91
    %170 = vmatprep.subr.mxu0 0.0
    %171 = vmatpush2.xpose.msra.mxu0 0.0
    %172 = vmatprep.subr.mxu0 0.0
    %173 = vmatpush2.xpose.msra.mxu0 0.0
    %174 = vmatprep.subr.mxu0 0.0
    %175 = vmatpush2.xpose.msra.mxu0 0.0
    %176 = vmatprep.subr.mxu0 0.0
    %177 = vmatpush2.xpose.msra.mxu0 0.0
    %178 = vmatprep.subr.mxu0 0.0
    %179 = vmatpush2.xpose.msra.mxu0 0.0
    %180 = vmatprep.subr.mxu0 0.0
    %181 = vmatpush2.xpose.msra.mxu0 0.0
    %182 = vmatprep.subr.mxu0 0.0
    %183 = vmatpush2.xpose.msra.mxu0 0.0
    %184 = vmatprep.subr.mxu0 0.0
    %185 = vmatpush2.xpose.msra.mxu0 0.0
    %186 = vmatprep.subr.mxu0 0.0
    %187 = vmatpush2.xpose.msra.mxu0 0.0
    %188 = vmatprep.subr.mxu0 0.0
    %189 = vmatpush2.xpose.msra.mxu0 0.0
    %190 = vmatprep.subr.mxu0 0.0
    %191 = vmatpush2.xpose.msra.mxu0 0.0
    %192 = vmatprep.subr.mxu0 0.0
    %193 = vmatpush2.xpose.msra.mxu0 0.0
    %194 = vmatprep.subr.mxu0 0.0
    %195 = vmatpush2.xpose.msra.mxu0 0.0
    %196 = vmatprep.subr.mxu0 0.0
    %197 = vmatpush2.xpose.msra.mxu0 0.0
    %198 = vmatprep.subr.mxu0 0.0
    %199 = vmatpush2.xpose.msra.mxu0 0.0
    %200 = vmatprep.subr.mxu0 0.0
    %201 = vmatpush2.xpose.msra.mxu0 0.0
    %202 = vmatprep.mubr.f32.mxu0 0.0
    %203 = vmatmul.mubr.f32.gmra.mxu0 %v79
    %v204 = vpop.f32.mrf.mxu0
    %v205 = vadd.f32 %v60, %v204
    %v206 = vpop.f32.mrf.mxu0
    %207 = vmatprep.mubr.f32.mxu0 0.0
    %208 = vmatmul.mubr.f32.gmra.mxu0 %v82
    %v209 = vpop.f32.mrf.mxu0
    %v210 = vadd.f32 %v65, %v209
    %v211 = vpop.f32.mrf.mxu0
    %212 = vmatprep.mubr.f32.mxu0 0.0
    %213 = vmatmul.mubr.f32.gmra.mxu0 %v85
    %v214 = vpop.f32.mrf.mxu0
    %v215 = vadd.f32 %v70, %v214
    %v216 = vpop.f32.mrf.mxu0
    %217 = vmatprep.mubr.f32.mxu0 0.0
    %218 = vmatmul.mubr.f32.gmra.mxu0 %v88
    %v219 = vpop.f32.mrf.mxu0
    %v220 = vadd.f32 %v75, %v219
    %v221 = vpop.f32.mrf.mxu0
    %222 = vdwg.mxu0
    %v223 = vmax.f32 %v205, 0.0
    %v224 = vmax.f32 %v210, 0.0
    %v225 = vmax.f32 %v215, 0.0
    %v226 = vmax.f32 %v220, 0.0
    %v227 = vld [vmem:[%s3] sm:$0xff]
    %v228 = vld [vmem:[%s3 + $0x8] sm:$0xff]
    %v229 = vld [vmem:[%s4] sm:$0xff]
    %v230 = vld [vmem:[%s4 + $0x8] sm:$0xff]
    %232 = vset.pattern.permute.xlu0 0
    %233 = vperm.xlu0 %232, %v229
    %v234 = vpop.permute.xlu0 %233
    %237 = vset.pattern.permute.xlu0 0
    %238 = vperm.xlu0 %237, %v230
    %v239 = vpop.permute.xlu0 %238
    %vm241 = vcmask 261120
    %v243 = vsel %vm241, %v227, 0
    %v246 = vsel %vm241, %v228, 0
    %248 = vmatprep.subr.mxu0 0.0
    %249 = vmatpush1.msra.mxu0 0.0
    %250 = vmatprep.subr.mxu0 0.0
    %251 = vmatpush1.msra.mxu0 0.0
    %252 = vmatprep.subr.mxu0 0.0
    %253 = vmatpush1.msra.mxu0 0.0
    %254 = vmatprep.subr.mxu0 0.0
    %255 = vmatpush1.msra.mxu0 0.0
    %256 = vmatprep.subr.mxu0 0.0
    %257 = vmatpush1.msra.mxu0 0.0
    %258 = vmatprep.subr.mxu0 0.0
    %259 = vmatpush1.msra.mxu0 0.0
    %260 = vmatprep.subr.mxu0 0.0
    %261 = vmatpush1.msra.mxu0 0.0
    %262 = vmatprep.subr.mxu0 0.0
    %263 = vmatpush1.msra.mxu0 0.0
    %264 = vmatprep.subr.mxu0 0.0
    %265 = vmatpush1.msra.mxu0 0.0
    %266 = vmatprep.subr.mxu0 0.0
    %267 = vmatpush1.msra.mxu0 0.0
    %268 = vmatprep.subr.mxu0 0.0
    %269 = vmatpush1.msra.mxu0 0.0
    %270 = vmatprep.subr.mxu0 0.0
    %271 = vmatpush1.msra.mxu0 0.0
    %272 = vmatprep.subr.mxu0 0.0
    %273 = vmatpush1.msra.mxu0 %v226
    %274 = vmatprep.subr.mxu0 0.0
    %275 = vmatpush1.msra.mxu0 %v225
    %276 = vmatprep.subr.mxu0 0.0
    %277 = vmatpush1.msra.mxu0 %v224
    %278 = vmatprep.subr.mxu0 0.0
    %279 = vmatpush1.msra.mxu0 %v223
    %280 = vmatprep.subr.mxu0 0.0
    %281 = vmatpush2.msra.mxu0 0.0
    %282 = vmatprep.subr.mxu0 0.0
    %283 = vmatpush2.msra.mxu0 0.0
    %284 = vmatprep.subr.mxu0 0.0
    %285 = vmatpush2.msra.mxu0 0.0
    %286 = vmatprep.subr.mxu0 0.0
    %287 = vmatpush2.msra.mxu0 0.0
    %288 = vmatprep.subr.mxu0 0.0
    %289 = vmatpush2.msra.mxu0 0.0
    %290 = vmatprep.subr.mxu0 0.0
    %291 = vmatpush2.msra.mxu0 0.0
    %292 = vmatprep.subr.mxu0 0.0
    %293 = vmatpush2.msra.mxu0 0.0
    %294 = vmatprep.subr.mxu0 0.0
    %295 = vmatpush2.msra.mxu0 0.0
    %296 = vmatprep.subr.mxu0 0.0
    %297 = vmatpush2.msra.mxu0 0.0
    %298 = vmatprep.subr.mxu0 0.0
    %299 = vmatpush2.msra.mxu0 0.0
    %300 = vmatprep.subr.mxu0 0.0
    %301 = vmatpush2.msra.mxu0 0.0
    %302 = vmatprep.subr.mxu0 0.0
    %303 = vmatpush2.msra.mxu0 0.0
    %304 = vmatprep.subr.mxu0 0.0
    %305 = vmatpush2.msra.mxu0 0.0
    %306 = vmatprep.subr.mxu0 0.0
    %307 = vmatpush2.msra.mxu0 0.0
    %308 = vmatprep.subr.mxu0 0.0
    %309 = vmatpush2.msra.mxu0 0.0
    %310 = vmatprep.subr.mxu0 0.0
    %311 = vmatpush2.msra.mxu0 0.0
    %312 = vmatprep.mubr.f32.mxu0 0.0
    %313 = vmatmul.mubr.f32.gmra.mxu0 %v243
    %v314 = vpop.f32.mrf.mxu0
    %v315 = vadd.f32 %v234, %v314
    %v316 = vpop.f32.mrf.mxu0
    %317 = vmatprep.mubr.f32.mxu0 0.0
    %318 = vmatmul.mubr.f32.gmra.mxu0 %v246
    %v319 = vpop.f32.mrf.mxu0
    %v320 = vadd.f32 %v239, %v319
    %v321 = vpop.f32.mrf.mxu0
    %322 = vdwg.mxu0
    %v323 = vmax.f32 %v315, 0.0
    %v324 = vmax.f32 %v320, 0.0
    %v325 = vld [vmem:[%s5] sm:$0xff]
    %v326 = vld [vmem:[%s6] sm:$0xff]
    %328 = vset.pattern.permute.xlu0 0
    %329 = vperm.xlu0 %328, %v326
    %v330 = vpop.permute.xlu0 %329
    %vm332 = vcmask 130048
    %v334 = vsel %vm332, %v325, 0
    %336 = vmatprep.subr.mxu0 0.0
    %337 = vmatpush1.msra.mxu0 0.0
    %338 = vmatprep.subr.mxu0 0.0
    %339 = vmatpush1.msra.mxu0 0.0
    %340 = vmatprep.subr.mxu0 0.0
    %341 = vmatpush1.msra.mxu0 0.0
    %342 = vmatprep.subr.mxu0 0.0
    %343 = vmatpush1.msra.mxu0 0.0
    %344 = vmatprep.subr.mxu0 0.0
    %345 = vmatpush1.msra.mxu0 0.0
    %346 = vmatprep.subr.mxu0 0.0
    %347 = vmatpush1.msra.mxu0 0.0
    %348 = vmatprep.subr.mxu0 0.0
    %349 = vmatpush1.msra.mxu0 0.0
    %350 = vmatprep.subr.mxu0 0.0
    %351 = vmatpush1.msra.mxu0 0.0
    %352 = vmatprep.subr.mxu0 0.0
    %353 = vmatpush1.msra.mxu0 0.0
    %354 = vmatprep.subr.mxu0 0.0
    %355 = vmatpush1.msra.mxu0 0.0
    %356 = vmatprep.subr.mxu0 0.0
    %357 = vmatpush1.msra.mxu0 0.0
    %358 = vmatprep.subr.mxu0 0.0
    %359 = vmatpush1.msra.mxu0 0.0
    %360 = vmatprep.subr.mxu0 0.0
    %361 = vmatpush1.msra.mxu0 0.0
    %362 = vmatprep.subr.mxu0 0.0
    %363 = vmatpush1.msra.mxu0 0.0
    %364 = vmatprep.subr.mxu0 0.0
    %365 = vmatpush1.msra.mxu0 %v324
    %366 = vmatprep.subr.mxu0 0.0
    %367 = vmatpush1.msra.mxu0 %v323
    %368 = vmatprep.subr.mxu0 0.0
    %369 = vmatpush2.msra.mxu0 0.0
    %370 = vmatprep.subr.mxu0 0.0
    %371 = vmatpush2.msra.mxu0 0.0
    %372 = vmatprep.subr.mxu0 0.0
    %373 = vmatpush2.msra.mxu0 0.0
    %374 = vmatprep.subr.mxu0 0.0
    %375 = vmatpush2.msra.mxu0 0.0
    %376 = vmatprep.subr.mxu0 0.0
    %377 = vmatpush2.msra.mxu0 0.0
    %378 = vmatprep.subr.mxu0 0.0
    %379 = vmatpush2.msra.mxu0 0.0
    %380 = vmatprep.subr.mxu0 0.0
    %381 = vmatpush2.msra.mxu0 0.0
    %382 = vmatprep.subr.mxu0 0.0
    %383 = vmatpush2.msra.mxu0 0.0
    %384 = vmatprep.subr.mxu0 0.0
    %385 = vmatpush2.msra.mxu0 0.0
    %386 = vmatprep.subr.mxu0 0.0
    %387 = vmatpush2.msra.mxu0 0.0
    %388 = vmatprep.subr.mxu0 0.0
    %389 = vmatpush2.msra.mxu0 0.0
    %390 = vmatprep.subr.mxu0 0.0
    %391 = vmatpush2.msra.mxu0 0.0
    %392 = vmatprep.subr.mxu0 0.0
    %393 = vmatpush2.msra.mxu0 0.0
    %394 = vmatprep.subr.mxu0 0.0
    %395 = vmatpush2.msra.mxu0 0.0
    %396 = vmatprep.subr.mxu0 0.0
    %397 = vmatpush2.msra.mxu0 0.0
    %398 = vmatprep.subr.mxu0 0.0
    %399 = vmatpush2.msra.mxu0 0.0
    %400 = vmatprep.mubr.f32.mxu0 0.0
    %401 = vmatmul.mubr.f32.gmra.mxu0 %v334
    %v402 = vpop.f32.mrf.mxu0
    %v403 = vadd.f32 %v330, %v402
    %v404 = vpop.f32.mrf.mxu0
    %405 = vdwg.mxu0
    %v406 = vmax.f32 %v403, 0.0
    %v407 = vld [vmem:[%s7] sm:$0x3]
    %v408 = vld [vmem:[%s8] sm:$0x3]
    %410 = vset.pattern.permute.xlu0 0
    %411 = vperm.xlu0 %410, %v408
    %v412 = vpop.permute.xlu0 %411
    %vm414 = vcmask 64512
    %v416 = vsel %vm414, %v407, 0
    %418 = vmatprep.subr.mxu0 0.0
    %419 = vmatpush1.msra.mxu0 0.0
    %420 = vmatprep.subr.mxu0 0.0
    %421 = vmatpush1.msra.mxu0 0.0
    %422 = vmatprep.subr.mxu0 0.0
    %423 = vmatpush1.msra.mxu0 0.0
    %424 = vmatprep.subr.mxu0 0.0
    %425 = vmatpush1.msra.mxu0 0.0
    %426 = vmatprep.subr.mxu0 0.0
    %427 = vmatpush1.msra.mxu0 0.0
    %428 = vmatprep.subr.mxu0 0.0
    %429 = vmatpush1.msra.mxu0 0.0
    %430 = vmatprep.subr.mxu0 0.0
    %431 = vmatpush1.msra.mxu0 0.0
    %432 = vmatprep.subr.mxu0 0.0
    %433 = vmatpush1.msra.mxu0 0.0
    %434 = vmatprep.subr.mxu0 0.0
    %435 = vmatpush1.msra.mxu0 0.0
    %436 = vmatprep.subr.mxu0 0.0
    %437 = vmatpush1.msra.mxu0 0.0
    %438 = vmatprep.subr.mxu0 0.0
    %439 = vmatpush1.msra.mxu0 0.0
    %440 = vmatprep.subr.mxu0 0.0
    %441 = vmatpush1.msra.mxu0 0.0
    %442 = vmatprep.subr.mxu0 0.0
    %443 = vmatpush1.msra.mxu0 0.0
    %444 = vmatprep.subr.mxu0 0.0
    %445 = vmatpush1.msra.mxu0 0.0
    %446 = vmatprep.subr.mxu0 0.0
    %447 = vmatpush1.msra.mxu0 0.0
    %448 = vmatprep.subr.mxu0 0.0
    %449 = vmatpush1.msra.mxu0 %v406
    %450 = vmatprep.subr.mxu0 0.0
    %451 = vmatpush2.msra.mxu0 0.0
    %452 = vmatprep.subr.mxu0 0.0
    %453 = vmatpush2.msra.mxu0 0.0
    %454 = vmatprep.subr.mxu0 0.0
    %455 = vmatpush2.msra.mxu0 0.0
    %456 = vmatprep.subr.mxu0 0.0
    %457 = vmatpush2.msra.mxu0 0.0
    %458 = vmatprep.subr.mxu0 0.0
    %459 = vmatpush2.msra.mxu0 0.0
    %460 = vmatprep.subr.mxu0 0.0
    %461 = vmatpush2.msra.mxu0 0.0
    %462 = vmatprep.subr.mxu0 0.0
    %463 = vmatpush2.msra.mxu0 0.0
    %464 = vmatprep.subr.mxu0 0.0
    %465 = vmatpush2.msra.mxu0 0.0
    %466 = vmatprep.subr.mxu0 0.0
    %467 = vmatpush2.msra.mxu0 0.0
    %468 = vmatprep.subr.mxu0 0.0
    %469 = vmatpush2.msra.mxu0 0.0
    %470 = vmatprep.subr.mxu0 0.0
    %471 = vmatpush2.msra.mxu0 0.0
    %472 = vmatprep.subr.mxu0 0.0
    %473 = vmatpush2.msra.mxu0 0.0
    %474 = vmatprep.subr.mxu0 0.0
    %475 = vmatpush2.msra.mxu0 0.0
    %476 = vmatprep.subr.mxu0 0.0
    %477 = vmatpush2.msra.mxu0 0.0
    %478 = vmatprep.subr.mxu0 0.0
    %479 = vmatpush2.msra.mxu0 0.0
    %480 = vmatprep.subr.mxu0 0.0
    %481 = vmatpush2.msra.mxu0 0.0
    %482 = vmatprep.mubr.f32.mxu0 0.0
    %483 = vmatmul.mubr.f32.gmra.mxu0 %v416
    %v484 = vpop.f32.mrf.mxu0
    %v485 = vadd.f32 %v412, %v484
    %v486 = vpop.f32.mrf.mxu0
    %487 = vdwg.mxu0
    %v489 = vrot.slane %v485, 7
    %v491 = vsub.f32 %v485, %v489
    %v492 = vand.u32 2147483647, %v491
    %v493 = vsub.f32 0.0, %v492
    %v494 = vmul.f32 %v493, 1.442695
    %v495 = vpow.pop %v494
    %v496 = vadd.f32 %v495, 1.0
    %v497 = vrcp.pop %v496
    %v498 = vmul.f32 1.0, %v497
    %vm499 = vcmp.ge.f32.partialorder %v491, 0.0
    %v500 = vsub.f32 1.0, %v498
    %v501 = vsel %vm499, %v498, %v500
    %v502 = vsub.f32 1.0, %v501
    %503 = vst [vmem:[#allocation2 - $0x1] sm:$0x2] %v502
    %504 = vst [vmem:[#allocation2] sm:$0x2] %v501
    // Predicated region
    $region38: #{tpu_custom_call.1} parent=1 // pred_check
      _
    $region39: #{tpu_custom_call.1} parent=1 // pred_check_branch
      %506 = sbr.rel (0) target = $region41
    $region40: #{tpu_custom_call.1} parent=1 // pred_region
      %s508 = ssub.s32 32, 32
      %509 = vsyncadd [#allocation3], %s508
      %s511 = sshll.u32 [#allocation2], 4
      %s512 = int_to_ptr.vmem [resolvable:$true] %s511
      %514 = dma.vmem_to_hbm [thread:$0]  %s512, 32, %s9, [#allocation3]
    $region41: #{tpu_custom_call.1} parent=1 // pred_fallthru
      _
    // Predicated region
    $region42: #{tpu_custom_call.1} parent=1 // pred_check
      _
    $region43: #{tpu_custom_call.1} parent=1 // pred_check_branch
      %516 = sbr.rel (0) target = $region45
    $region44: #{tpu_custom_call.1} parent=1 // pred_region
      %517 = dma.done [#allocation3], 32
    $region45: #{tpu_custom_call.1} parent=1 // pred_fallthru
      _
    %518 = vsyncpa [#allocation3], 1

</llo_original>
